<compile_context>
chip_gen: v7x
topology: tpu7x:2x2x1
jax: 0.10.0
libtpu: 0.0.40
codegen_flags: <defaults>
</compile_context>

<pallas_src>
import functools

import jax
import jax.numpy as jnp
from jax import lax
from jax.experimental import pallas as pl
from jax.experimental.pallas import tpu as pltpu


LN_EPS = 1e-5
_LANE = 128
_SUBLANE = 8


def _round_up(x, m):
    return ((x + m - 1) // m) * m


def _vmem_capacity_bytes():
    """Physical VMEM of the attached TPU (128 MiB fallback if query fails)."""
    try:
        return int(pltpu.get_tpu_info().vmem_capacity_bytes)
    except Exception:
        return 128 * 1024 * 1024


# -----------------------------------------------------------------------------
# Kernel
# -----------------------------------------------------------------------------
def _norm_res_block_kernel(x_ref, g_ref, b_ref, w1_ref, b1_ref, w2_ref, b2_ref,
                           o_ref, acc_ref, *, d_real, n_hc):
    """Fused LayerNorm -> fc1 -> GELU -> fc2 -> +residual for one token tile.

    w1_ref: (n_hc, Dp, hc) bf16   (chunk-major fc1 weight)
    b1_ref: (n_hc, 1, hc)  f32
    w2_ref: (n_hc, hc, Dp) bf16   (chunk-major fc2 weight)
    acc_ref: (tm, Dp) f32 scratch accumulator for the fc2 output.
    """
    x = x_ref[...].astype(jnp.float32)                        # (tm, Dp)
    dp = x.shape[-1]

    # --- ESM1bLayerNorm over the real embedding dim --------------------------
    # Padded lanes of x are zero, so the plain sum already equals the real sum.
    inv_d = jnp.float32(1.0 / d_real)
    mean = jnp.sum(x, axis=-1, keepdims=True) * inv_d
    centered = x - mean
    if dp != d_real:                                          # mask pad lanes for var
        col = lax.broadcasted_iota(jnp.int32, (1, dp), 1)
        c_sq = jnp.where(col < d_real, centered, 0.0)
    else:
        c_sq = centered
    var = jnp.sum(c_sq * c_sq, axis=-1, keepdims=True) * inv_d
    xn = centered * lax.rsqrt(var + LN_EPS)
    # Padded gamma/beta lanes are 0 -> padded lanes of xn_bf are exactly 0.
    xn_bf = (xn * g_ref[...] + b_ref[...]).astype(jnp.bfloat16)

    # --- inner layer: FFN, hidden dim chunked, MXU bf16 + f32 accumulate -----
    acc_ref[...] = jnp.zeros_like(acc_ref)

    def h_chunk(c, carry):
        h = jnp.dot(xn_bf, w1_ref[c], preferred_element_type=jnp.float32)
        h = jax.nn.gelu(h + b1_ref[c], approximate=True)      # tanh-GELU (EUP), f32
        acc_ref[...] += jnp.dot(h.astype(jnp.bfloat16), w2_ref[c],
                                preferred_element_type=jnp.float32)
        return carry

    lax.fori_loop(0, n_hc, h_chunk, 0, unroll=True)

    y = acc_ref[...] + b2_ref[...]

    # --- residual add: re-read x_ref so the top-of-kernel load isn't kept live
    o_ref[...] = (y + x_ref[...].astype(jnp.float32)).astype(o_ref.dtype)


# -----------------------------------------------------------------------------
# One-time parameter preparation (hoisted out of the per-call path)
# -----------------------------------------------------------------------------
def prepare_params(gamma, beta, w1, b1, w2, b2, *, hidden_chunk=1024):
    """Pad to lane-dense shapes, cast weights to bf16, reorder chunk-major.

    Returns (gamma2, beta2, w1_p, b1_p, w2_p, b2_2) where
      w1_p: (n_hc, Dp, hc) bf16, b1_p: (n_hc, 1, hc) f32, w2_p: (n_hc, hc, Dp) bf16.
    """
    D = int(gamma.shape[0])
    H = int(w1.shape[1])
    Dp = _round_up(D, _LANE)
    hc = min(_round_up(H, _LANE), _round_up(hidden_chunk, _LANE))
    Hp = _round_up(_round_up(H, _LANE), hc)
    n_hc = Hp // hc

    gamma2 = jnp.zeros((1, Dp), jnp.float32).at[0, :D].set(gamma.astype(jnp.float32))
    beta2 = jnp.zeros((1, Dp), jnp.float32).at[0, :D].set(beta.astype(jnp.float32))
    b2_2 = jnp.zeros((1, Dp), jnp.float32).at[0, :D].set(b2.astype(jnp.float32))

    w1_p = jnp.zeros((Dp, Hp), jnp.bfloat16).at[:D, :H].set(w1.astype(jnp.bfloat16))
    w1_p = w1_p.reshape(Dp, n_hc, hc).transpose(1, 0, 2)          # (n_hc, Dp, hc)
    b1_p = jnp.zeros((Hp,), jnp.float32).at[:H].set(b1.astype(jnp.float32))
    b1_p = b1_p.reshape(n_hc, 1, hc)                              # (n_hc, 1, hc)
    w2_p = jnp.zeros((Hp, Dp), jnp.bfloat16).at[:H, :D].set(w2.astype(jnp.bfloat16))
    w2_p = w2_p.reshape(n_hc, hc, Dp)                             # (n_hc, hc, Dp)

    return gamma2, beta2, w1_p, b1_p, w2_p, b2_2


# -----------------------------------------------------------------------------
# Wrapper
# -----------------------------------------------------------------------------
def normalized_residual_block(x, gamma2, beta2, w1_p, b1_p, w2_p, b2_2, *, tm=None):
    """x: (seq, batch, embed) -> same shape. Params from prepare_params()."""
    S, B, D = x.shape
    n_tokens = S * B
    n_hc, Dp, hc = w1_p.shape
    Hp = n_hc * hc

    itemsize = jnp.dtype(x.dtype).itemsize
    min_rows = _SUBLANE * max(1, 4 // itemsize)   # 8 rows f32, 16 bf16, ...

    # --- generation-aware tile / VMEM budget ----------------------------------
    vmem_cap = _vmem_capacity_bytes()
    vmem_budget = int(0.85 * vmem_cap)            # working-set target
    if tm is None:
        tm = 256 if vmem_cap <= 64 * 1024 * 1024 else 512   # v7x vs v5e/v6e

    def est_bytes(t):
        return (2 * t * Dp * itemsize             # x tile, double-buffered
                + 2 * t * Dp * itemsize           # out tile, double-buffered
                + 2 * Dp * Hp * 2                 # fc1 + fc2 weights, bf16, 1 buffer
                + (3 * Dp + Hp) * 4               # gamma/beta/b1/b2
                + t * Dp * 4                      # f32 accumulator scratch
                + t * Dp * (4 + 2)                # xn f32 + bf16
                + t * hc * (4 + 2)                # hidden chunk f32 + bf16
                + t * Dp * 4)                     # LN temporaries / headroom

    tm_req = _round_up(max(tm, min_rows), min_rows)
    while tm_req > min_rows and est_bytes(tm_req) > vmem_budget:
        tm_req = max(min_rows, _round_up(tm_req // 2, min_rows))

    # Target >= 4 grid steps (>= 2 tiles per TensorCore on v7x) when tokens allow.
    tm_cap = max(min_rows, _round_up((n_tokens + 3) // 4, min_rows))
    tm_eff = min(tm_req, tm_cap)
    n_pad = _round_up(max(n_tokens, tm_eff), tm_eff)

    # --- activations: skip pad / slice when already aligned -------------------
    x_flat = x.reshape(n_tokens, D)
    no_pad = (Dp == D) and (n_pad == n_tokens)
    if no_pad:
        x2 = x_flat
    elif Dp == D:
        x2 = jnp.zeros((n_pad, D), x.dtype).at[:n_tokens, :].set(x_flat)
    else:
        x2 = jnp.zeros((n_pad, Dp), x.dtype).at[:n_tokens, :D].set(x_flat)

    grid = (n_pad // tm_eff,)

    vmem_limit = int(min(max(int(est_bytes(tm_eff) * 1.2), 32 * 1024 * 1024),
                         int(0.9 * vmem_cap)))

    resident = dict(pipeline_mode=pl.Buffered(1))   # constant index_map -> 1 buffer
    kernel = functools.partial(_norm_res_block_kernel, d_real=D, n_hc=n_hc)

    out2 = pl.pallas_call(
        kernel,
        out_shape=jax.ShapeDtypeStruct((n_pad, Dp), x.dtype),
        grid_spec=pltpu.PrefetchScalarGridSpec(
            num_scalar_prefetch=0,
            grid=grid,
            in_specs=[
                pl.BlockSpec((tm_eff, Dp), lambda i: (i, 0)),                 # x tile
                pl.BlockSpec((1, Dp), lambda i: (0, 0), **resident),          # LN gamma
                pl.BlockSpec((1, Dp), lambda i: (0, 0), **resident),          # LN beta
                pl.BlockSpec((n_hc, Dp, hc), lambda i: (0, 0, 0), **resident),  # fc1 W (bf16)
                pl.BlockSpec((n_hc, 1, hc), lambda i: (0, 0, 0), **resident),   # fc1 bias
                pl.BlockSpec((n_hc, hc, Dp), lambda i: (0, 0, 0), **resident),  # fc2 W (bf16)
                pl.BlockSpec((1, Dp), lambda i: (0, 0), **resident),          # fc2 bias
            ],
            out_specs=pl.BlockSpec((tm_eff, Dp), lambda i: (i, 0)),
            scratch_shapes=[pltpu.VMEM((tm_eff, Dp), jnp.float32)],           # fc2 acc
        ),
        compiler_params=pltpu.CompilerParams(
            dimension_semantics=("parallel",),
            vmem_limit_bytes=vmem_limit),
    )(x2, gamma2, beta2, w1_p, b1_p, w2_p, b2_2)

    if not no_pad:
        out2 = out2[:n_tokens, :D]
    return out2.reshape(S, B, D)


# -----------------------------------------------------------------------------
# Pure-JAX reference mirroring the kernel numerics (bf16 MXU, f32 elementwise)
# -----------------------------------------------------------------------------
def _reference(x, gamma, beta, w1, b1, w2, b2):
    xf = x.astype(jnp.float32)
    mean = jnp.mean(xf, axis=-1, keepdims=True)
    var = jnp.mean((xf - mean) ** 2, axis=-1, keepdims=True)
    xn = (xf - mean) * lax.rsqrt(var + LN_EPS)
    xn = xn * gamma + beta
    h = jnp.dot(xn.astype(jnp.bfloat16), w1.astype(jnp.bfloat16),
                preferred_element_type=jnp.float32) + b1
    h = jax.nn.gelu(h, approximate=True)
    y = jnp.dot(h.astype(jnp.bfloat16), w2.astype(jnp.bfloat16),
                preferred_element_type=jnp.float32) + b2
    return (y + xf).astype(x.dtype)


if __name__ == "__main__":
    # Small shapes consistent with the module: seq=8, batch=2, embedding_dim=32,
    # FFN hidden = 4 * embedding_dim = 128.
    S, B, D = 8, 2, 32
    H = 4 * D

    key = jax.random.PRNGKey(0)
    kx, kw1, kw2, kg, kb = jax.random.split(key, 5)

    x = jax.random.normal(kx, (S, B, D), dtype=jnp.float32)

    # Deterministic synthetic parameters (module __init__ defines the shapes).
    gamma = 1.0 + 0.01 * jax.random.normal(kg, (D,), dtype=jnp.float32)
    beta = 0.01 * jax.random.normal(kb, (D,), dtype=jnp.float32)
    w1 = jax.random.normal(kw1, (D, H), dtype=jnp.float32) * (1.0 / jnp.sqrt(D))
    b1 = jnp.zeros((H,), dtype=jnp.float32)
    w2 = jax.random.normal(kw2, (H, D), dtype=jnp.float32) * (1.0 / jnp.sqrt(H))
    b2 = jnp.zeros((D,), dtype=jnp.float32)

    # One-time weight pad/cast, outside the per-call path.
    params = prepare_params(gamma, beta, w1, b1, w2, b2)
    params = jax.block_until_ready(params)

    run = jax.jit(normalized_residual_block)
    out = run(x, *params)
    out = jax.block_until_ready(out)

    ref = _reference(x, gamma, beta, w1, b1, w2, b2)
    assert out.shape == x.shape and out.dtype == x.dtype
    assert jnp.allclose(out, ref, atol=1e-3, rtol=1e-3), "mismatch vs reference"

    # The generic module may forward extra outputs of the inner layer as a tuple;
    # the FFN inner layer returns a single tensor, so forward returns x + residual.
    print("KERNEL_OK")
</pallas_src>

<mosaic_0001>
module attributes {stable_mosaic.version = 11 : i64} {
  func.func @_norm_res_block_kernel(%arg0: i32, %arg1: memref<8x128xf32, #tpu.memory_space<vmem>>, %arg2: memref<1x128xf32, #tpu.memory_space<vmem>>, %arg3: memref<1x128xf32, #tpu.memory_space<vmem>>, %arg4: memref<1x128x128xbf16, #tpu.memory_space<vmem>>, %arg5: memref<1x1x128xf32, #tpu.memory_space<vmem>>, %arg6: memref<1x128x128xbf16, #tpu.memory_space<vmem>>, %arg7: memref<1x128xf32, #tpu.memory_space<vmem>>, %arg8: memref<8x128xf32, #tpu.memory_space<vmem>>, %arg9: memref<8x128xf32, #tpu.memory_space<vmem>>) attributes {dimension_semantics = [#tpu.dimension_semantics<parallel>], iteration_bounds = array<i64: 2>, scalar_prefetch = 0 : i64, scratch_operands = 1 : i64, tpu.core_type = #tpu.core_type<tc>, window_params = [{transform_indices = @transform_0, window_bounds = array<i64: 8, 128>}, {pipeline_mode = #tpu.pipeline_mode<synchronous>, transform_indices = @transform_1, window_bounds = array<i64: 1, 128>}, {pipeline_mode = #tpu.pipeline_mode<synchronous>, transform_indices = @transform_2, window_bounds = array<i64: 1, 128>}, {pipeline_mode = #tpu.pipeline_mode<synchronous>, transform_indices = @transform_3, window_bounds = array<i64: 1, 128, 128>}, {pipeline_mode = #tpu.pipeline_mode<synchronous>, transform_indices = @transform_4, window_bounds = array<i64: 1, 1, 128>}, {pipeline_mode = #tpu.pipeline_mode<synchronous>, transform_indices = @transform_5, window_bounds = array<i64: 1, 128, 128>}, {pipeline_mode = #tpu.pipeline_mode<synchronous>, transform_indices = @transform_6, window_bounds = array<i64: 1, 128>}, {transform_indices = @transform_7, window_bounds = array<i64: 8, 128>}]} {
    %c0 = arith.constant 0 : index
    %c0_0 = arith.constant 0 : index
    %0 = vector.load %arg1[%c0, %c0_0] : memref<8x128xf32, #tpu.memory_space<vmem>>, vector<8x128xf32>
    %cst = arith.constant dense<0.000000e+00> : vector<8xf32>
    %1 = vector.multi_reduction <add>, %0, %cst [1] : vector<8x128xf32> to vector<8xf32>
    %2 = vector.shape_cast %1 : vector<8xf32> to vector<8x1xf32>
    %cst_1 = arith.constant 3.125000e-02 : f32
    %3 = vector.broadcast %cst_1 : f32 to vector<8x1xf32>
    %4 = arith.mulf %2, %3 : vector<8x1xf32>
    %5 = vector.broadcast %4 : vector<8x1xf32> to vector<8x128xf32>
    %6 = arith.subf %0, %5 : vector<8x128xf32>
    %7 = tpu.iota {dimensions = array<i32: 1>} : vector<1x128xi32>
    %c32_i32 = arith.constant 32 : i32
    %8 = vector.broadcast %c32_i32 : i32 to vector<1x128xi32>
    %9 = arith.cmpi slt, %7, %8 : vector<1x128xi32>
    %cst_2 = arith.constant 0.000000e+00 : f32
    %10 = vector.shape_cast %9 : vector<1x128xi1> to vector<1x128xi1>
    %11 = vector.broadcast %10 : vector<1x128xi1> to vector<8x128xi1>
    %12 = vector.broadcast %cst_2 : f32 to vector<8x128xf32>
    %13 = arith.select %11, %6, %12 : vector<8x128xi1>, vector<8x128xf32>
    %14 = arith.mulf %13, %13 : vector<8x128xf32>
    %cst_3 = arith.constant dense<0.000000e+00> : vector<8xf32>
    %15 = vector.multi_reduction <add>, %14, %cst_3 [1] : vector<8x128xf32> to vector<8xf32>
    %16 = vector.shape_cast %15 : vector<8xf32> to vector<8x1xf32>
    %cst_4 = arith.constant 3.125000e-02 : f32
    %17 = vector.broadcast %cst_4 : f32 to vector<8x1xf32>
    %18 = arith.mulf %16, %17 : vector<8x1xf32>
    %cst_5 = arith.constant 9.99999974E-6 : f32
    %19 = vector.broadcast %cst_5 : f32 to vector<8x1xf32>
    %20 = arith.addf %18, %19 : vector<8x1xf32>
    %21 = math.rsqrt %20 : vector<8x1xf32>
    %22 = vector.broadcast %21 : vector<8x1xf32> to vector<8x128xf32>
    %23 = arith.mulf %6, %22 : vector<8x128xf32>
    %c0_6 = arith.constant 0 : index
    %c0_7 = arith.constant 0 : index
    %24 = vector.load %arg2[%c0_6, %c0_7] : memref<1x128xf32, #tpu.memory_space<vmem>>, vector<1x128xf32>
    %25 = vector.broadcast %24 : vector<1x128xf32> to vector<8x128xf32>
    %26 = arith.mulf %23, %25 : vector<8x128xf32>
    %c0_8 = arith.constant 0 : index
    %c0_9 = arith.constant 0 : index
    %27 = vector.load %arg3[%c0_8, %c0_9] : memref<1x128xf32, #tpu.memory_space<vmem>>, vector<1x128xf32>
    %28 = vector.broadcast %27 : vector<1x128xf32> to vector<8x128xf32>
    %29 = arith.addf %26, %28 : vector<8x128xf32>
    %30 = arith.truncf %29 : vector<8x128xf32> to vector<8x128xbf16>
    %cst_10 = arith.constant 0.000000e+00 : f32
    %31 = vector.broadcast %cst_10 : f32 to vector<8x128xf32>
    %c0_11 = arith.constant 0 : index
    %c0_12 = arith.constant 0 : index
    %32 = vector.load %arg9[%c0_11, %c0_12] : memref<8x128xf32, #tpu.memory_space<vmem>>, vector<8x128xf32>
    tpu.vector_store %arg9[%c0_11, %c0_12], %31 {strides = array<i32>} : memref<8x128xf32, #tpu.memory_space<vmem>>, vector<8x128xf32>,
    %c0_i32 = arith.constant 0 : i32
    %33 = arith.index_cast %c0_i32 : i32 to index
    %c0_13 = arith.constant 0 : index
    %c0_14 = arith.constant 0 : index
    %34 = vector.load %arg4[%33, %c0_13, %c0_14] : memref<1x128x128xbf16, #tpu.memory_space<vmem>>, vector<1x128x128xbf16>
    %35 = vector.shape_cast %34 : vector<1x128x128xbf16> to vector<128x128xbf16>
    %cst_15 = arith.constant dense<0.000000e+00> : vector<8x128xf32>
    %36 = tpu.matmul %30, %35, %cst_15 {dimension_numbers = #tpu.dot_dimension_numbers<[1], [0], [0], [1], [0, 0, 1, 1], [], []>} : vector<8x128xbf16>, vector<128x128xbf16>, vector<8x128xf32> -> vector<8x128xf32>
    %37 = arith.index_cast %c0_i32 : i32 to index
    %c0_16 = arith.constant 0 : index
    %c0_17 = arith.constant 0 : index
    %38 = vector.load %arg5[%37, %c0_16, %c0_17] : memref<1x1x128xf32, #tpu.memory_space<vmem>>, vector<1x1x128xf32>
    %39 = vector.shape_cast %38 : vector<1x1x128xf32> to vector<1x128xf32>
    %40 = vector.broadcast %39 : vector<1x128xf32> to vector<8x128xf32>
    %41 = arith.addf %36, %40 : vector<8x128xf32>
    %42 = arith.mulf %41, %41 : vector<8x128xf32>
    %43 = arith.mulf %41, %42 : vector<8x128xf32>
    %cst_18 = arith.constant 4.471500e-02 : f32
    %44 = vector.broadcast %cst_18 : f32 to vector<8x128xf32>
    %45 = arith.mulf %44, %43 : vector<8x128xf32>
    %46 = arith.addf %41, %45 : vector<8x128xf32>
    %cst_19 = arith.constant 0.797884583 : f32
    %47 = vector.broadcast %cst_19 : f32 to vector<8x128xf32>
    %48 = arith.mulf %47, %46 : vector<8x128xf32>
    %49 = math.tanh %48 : vector<8x128xf32>
    %cst_20 = arith.constant 1.000000e+00 : f32
    %50 = vector.broadcast %cst_20 : f32 to vector<8x128xf32>
    %51 = arith.addf %50, %49 : vector<8x128xf32>
    %cst_21 = arith.constant 5.000000e-01 : f32
    %52 = vector.broadcast %cst_21 : f32 to vector<8x128xf32>
    %53 = arith.mulf %52, %51 : vector<8x128xf32>
    %54 = arith.mulf %41, %53 : vector<8x128xf32>
    %c0_22 = arith.constant 0 : index
    %c0_23 = arith.constant 0 : index
    %55 = vector.load %arg9[%c0_22, %c0_23] : memref<8x128xf32, #tpu.memory_space<vmem>>, vector<8x128xf32>
    %56 = arith.truncf %54 : vector<8x128xf32> to vector<8x128xbf16>
    %57 = arith.index_cast %c0_i32 : i32 to index
    %c0_24 = arith.constant 0 : index
    %c0_25 = arith.constant 0 : index
    %58 = vector.load %arg6[%57, %c0_24, %c0_25] : memref<1x128x128xbf16, #tpu.memory_space<vmem>>, vector<1x128x128xbf16>
    %59 = vector.shape_cast %58 : vector<1x128x128xbf16> to vector<128x128xbf16>
    %cst_26 = arith.constant dense<0.000000e+00> : vector<8x128xf32>
    %60 = tpu.matmul %56, %59, %cst_26 {dimension_numbers = #tpu.dot_dimension_numbers<[1], [0], [0], [1], [0, 0, 1, 1], [], []>} : vector<8x128xbf16>, vector<128x128xbf16>, vector<8x128xf32> -> vector<8x128xf32>
    %61 = arith.addf %55, %60 : vector<8x128xf32>
    %c0_27 = arith.constant 0 : index
    %c0_28 = arith.constant 0 : index
    %62 = vector.load %arg9[%c0_27, %c0_28] : memref<8x128xf32, #tpu.memory_space<vmem>>, vector<8x128xf32>
    tpu.vector_store %arg9[%c0_27, %c0_28], %61 {strides = array<i32>} : memref<8x128xf32, #tpu.memory_space<vmem>>, vector<8x128xf32>,
    %c1_i32 = arith.constant 1 : i32
    %c0_29 = arith.constant 0 : index
    %c0_30 = arith.constant 0 : index
    %63 = vector.load %arg9[%c0_29, %c0_30] : memref<8x128xf32, #tpu.memory_space<vmem>>, vector<8x128xf32>
    %c0_31 = arith.constant 0 : index
    %c0_32 = arith.constant 0 : index
    %64 = vector.load %arg7[%c0_31, %c0_32] : memref<1x128xf32, #tpu.memory_space<vmem>>, vector<1x128xf32>
    %65 = vector.broadcast %64 : vector<1x128xf32> to vector<8x128xf32>
    %66 = arith.addf %63, %65 : vector<8x128xf32>
    %c0_33 = arith.constant 0 : index
    %c0_34 = arith.constant 0 : index
    %67 = vector.load %arg1[%c0_33, %c0_34] : memref<8x128xf32, #tpu.memory_space<vmem>>, vector<8x128xf32>
    %68 = arith.addf %66, %67 : vector<8x128xf32>
    %c0_35 = arith.constant 0 : index
    %c0_36 = arith.constant 0 : index
    %69 = vector.load %arg8[%c0_35, %c0_36] : memref<8x128xf32, #tpu.memory_space<vmem>>, vector<8x128xf32>
    tpu.vector_store %arg8[%c0_35, %c0_36], %68 {strides = array<i32>} : memref<8x128xf32, #tpu.memory_space<vmem>>, vector<8x128xf32>,
    return
  }
  func.func @transform_0(%arg0: i32) -> (i32, i32) {
    %c0_i32 = arith.constant 0 : i32
    %c0_i32_0 = arith.constant 0 : i32
    return %arg0, %c0_i32 : i32, i32
  }
  func.func @transform_1(%arg0: i32) -> (i32, i32) {
    %c0_i32 = arith.constant 0 : i32
    %c0_i32_0 = arith.constant 0 : i32
    %c0_i32_1 = arith.constant 0 : i32
    return %c0_i32, %c0_i32_0 : i32, i32
  }
  func.func @transform_2(%arg0: i32) -> (i32, i32) {
    %c0_i32 = arith.constant 0 : i32
    %c0_i32_0 = arith.constant 0 : i32
    %c0_i32_1 = arith.constant 0 : i32
    return %c0_i32, %c0_i32_0 : i32, i32
  }
  func.func @transform_3(%arg0: i32) -> (i32, i32, i32) {
    %c0_i32 = arith.constant 0 : i32
    %c0_i32_0 = arith.constant 0 : i32
    %c0_i32_1 = arith.constant 0 : i32
    %c0_i32_2 = arith.constant 0 : i32
    return %c0_i32, %c0_i32_0, %c0_i32_1 : i32, i32, i32
  }
  func.func @transform_4(%arg0: i32) -> (i32, i32, i32) {
    %c0_i32 = arith.constant 0 : i32
    %c0_i32_0 = arith.constant 0 : i32
    %c0_i32_1 = arith.constant 0 : i32
    %c0_i32_2 = arith.constant 0 : i32
    return %c0_i32, %c0_i32_0, %c0_i32_1 : i32, i32, i32
  }
  func.func @transform_5(%arg0: i32) -> (i32, i32, i32) {
    %c0_i32 = arith.constant 0 : i32
    %c0_i32_0 = arith.constant 0 : i32
    %c0_i32_1 = arith.constant 0 : i32
    %c0_i32_2 = arith.constant 0 : i32
    return %c0_i32, %c0_i32_0, %c0_i32_1 : i32, i32, i32
  }
  func.func @transform_6(%arg0: i32) -> (i32, i32) {
    %c0_i32 = arith.constant 0 : i32
    %c0_i32_0 = arith.constant 0 : i32
    %c0_i32_1 = arith.constant 0 : i32
    return %c0_i32, %c0_i32_0 : i32, i32
  }
  func.func @transform_7(%arg0: i32) -> (i32, i32) {
    %c0_i32 = arith.constant 0 : i32
    %c0_i32_0 = arith.constant 0 : i32
    return %arg0, %c0_i32 : i32, i32
  }
}

</mosaic_0001>

<llo_original>
// kernel: normalized_residual_block.1
$region0: #{normalized_residual_block.1}
  #allocation0 [shape = 'u32[]', space=smem, size = 0x4, offset = 0x4, fixed_abs, tag = 'smem constant byte address 0x4 - core index']
  #allocation1 [shape = 'u32[144,128]{1,0:T(1,128)}', space=vmem, size = 0x12000, scoped, tag = 'internal scratch']
  #allocation2 [shape = 'f32[8,128]{1,0:T(8,128)}', space=vmem, size = 0x1000, scoped, tag = 'scratch operand']
  %s0 = inlined_call_operand.vmem [shape: f32[16,128], index: 0, kind: input, shape index: {}]
  %s1 = inlined_call_operand.vmem [shape: f32[1,128], index: 1, kind: input, shape index: {}]
  %s2 = inlined_call_operand.vmem [shape: f32[1,128], index: 2, kind: input, shape index: {}]
  %s3 = inlined_call_operand.vmem [shape: bf16[1,128,128], index: 3, kind: input, shape index: {}]
  %s4 = inlined_call_operand.vmem [shape: f32[1,1,128], index: 4, kind: input, shape index: {}]
  %s5 = inlined_call_operand.hbm [shape: bf16[1,128,128], index: 5, kind: input, shape index: {}]
  %s6 = inlined_call_operand.vmem [shape: f32[1,128], index: 6, kind: input, shape index: {}]
  %s7 = inlined_call_operand.hbm [shape: f32[16,128], index: 7, kind: output, shape index: {}]
  %s8 = sld [smem:[#allocation0]]
  $region65: #{normalized_residual_block.1} parent=0
    _
  %s10 = ssub.s32 1, %s8
  %s11 = scalar_select 0, %s10, %s8
  $region1: #{normalized_residual_block.1} parent=0
    #allocation3 [shape = 'u8[32768]{0}', space=vmem, size = 0x8000, scoped, tag = 'input window, operand 5, single buffered']
    #allocation4 [shape = 's32[2]{0}', space=sflag, size = 0x8, scoped, tag = 'scoped memory for normalized_residual_block.1']
    #allocation5 [shape = 's32[2]{0}', space=sflag, size = 0x8, scoped, tag = 'scoped memory for normalized_residual_block.1']
    #allocation6 [shape = 'u8[8192]{0}', space=vmem, size = 0x2000, scoped, tag = 'output window, operand 0']
    %12 = vsyncpa [#allocation4], 0
    %13 = vsyncpa [#allocation5], 0
    %s14 = scalar_lea.sflag [#allocation5], 1
    %15 = vsyncpa %s14, 0
    loop: start=0, step=1, limit=4
    $region2: #{normalized_residual_block.1} parent=1 // loop_pre_header
      _
    $region3: #{normalized_residual_block.1} parent=1 // loop_header
      %s17 = sphi 0, %s21
      %p18 = scmp.ge.s32.totalorder %s17, 4
      %s27 = sphi 0, %s29
      %s30 = sphi 0, %s27
      %s31 = sphi 0, %s30
      %s47 = sphi 0, %s31
      %s51 = sphi 0, %s51
      %s53 = sphi 0, %s51
      %s54 = sphi 0, %s53
      %s68 = sphi 0, %s54
      %s72 = sphi 0, %s72
      %s74 = sphi 0, %s72
      %s75 = sphi 0, %s74
      %s89 = sphi 0, %s75
      %s93 = sphi 0, %s93
      %s95 = sphi 0, %s93
      %s96 = sphi 0, %s95
      %s110 = sphi 0, %s96
      %s114 = sphi 0, %s114
      %s116 = sphi 0, %s114
      %s117 = sphi 0, %s116
      %s131 = sphi 0, %s117
      %s135 = sphi 0, %s135
      %s137 = sphi 0, %s135
      %s138 = sphi 0, %s137
      %s152 = sphi 0, %s138
      %s156 = sphi 0, %s156
      %s158 = sphi 0, %s156
      %s159 = sphi 0, %s158
      %s173 = sphi 0, %s159
      %s179 = sphi 0, %s181
      %s182 = sphi 0, %s179
      %s183 = sphi 0, %s182
      %s199 = sphi 0, %s183
    $region4: #{normalized_residual_block.1} parent=1 // loop_header_branch
      %20 = sbr.rel (%p18) target = $region8
    $region5: #{normalized_residual_block.1} parent=1 // loop_body
      %s22 = ssub.s32 %s17, 1
      %s23 = ssub.s32 %s17, 2
      %s24 = sadd.s32 %s17, 1
      %s25 = ssub.s32 %s17, %s24
      %p26 = scmp.eq.s32.totalorder %s25, 0
      %s28 = sadd.s32 %s27, 1
      %s29 = scalar_select %p26, %s27, %s28
      %p32 = pneg %p26
      %p33 = scmp.eq.s32.totalorder %s17, 1
      %p34 = por %p32, %p33
      %p35 = scmp.ne.s32.totalorder %s27, %s30
      %p36 = scmp.eq.s32.totalorder %s17, 0
      %p37 = por %p35, %p36
      %p38 = scmp.ne.s32.totalorder %s27, %s30
      %p39 = scmp.eq.s32.totalorder %s22, 1
      %p40 = por %p38, %p39
      %p41 = scmp.ne.s32.totalorder %s30, %s31
      %p42 = scmp.eq.s32.totalorder %s22, 0
      %p43 = por %p41, %p42
      %p44 = scmp.ne.s32.totalorder %s30, %s31
      %p45 = scmp.eq.s32.totalorder %s23, 1
      %p46 = por %p44, %p45
      %p48 = scmp.ne.s32.totalorder %s31, %s47
      %p49 = scmp.eq.s32.totalorder %s23, 0
      %p50 = por %p48, %p49
      %s52 = sadd.s32 %s51, 1
      %p55 = scmp.eq.s32.totalorder %s17, 1
      %p56 = scmp.ne.s32.totalorder %s51, %s53
      %p57 = scmp.eq.s32.totalorder %s17, 0
      %p58 = por %p56, %p57
      %p59 = scmp.ne.s32.totalorder %s51, %s53
      %p60 = scmp.eq.s32.totalorder %s22, 1
      %p61 = por %p59, %p60
      %p62 = scmp.ne.s32.totalorder %s53, %s54
      %p63 = scmp.eq.s32.totalorder %s22, 0
      %p64 = por %p62, %p63
      %p65 = scmp.ne.s32.totalorder %s53, %s54
      %p66 = scmp.eq.s32.totalorder %s23, 1
      %p67 = por %p65, %p66
      %p69 = scmp.ne.s32.totalorder %s54, %s68
      %p70 = scmp.eq.s32.totalorder %s23, 0
      %p71 = por %p69, %p70
      %s73 = sadd.s32 %s72, 1
      %p76 = scmp.eq.s32.totalorder %s17, 1
      %p77 = scmp.ne.s32.totalorder %s72, %s74
      %p78 = scmp.eq.s32.totalorder %s17, 0
      %p79 = por %p77, %p78
      %p80 = scmp.ne.s32.totalorder %s72, %s74
      %p81 = scmp.eq.s32.totalorder %s22, 1
      %p82 = por %p80, %p81
      %p83 = scmp.ne.s32.totalorder %s74, %s75
      %p84 = scmp.eq.s32.totalorder %s22, 0
      %p85 = por %p83, %p84
      %p86 = scmp.ne.s32.totalorder %s74, %s75
      %p87 = scmp.eq.s32.totalorder %s23, 1
      %p88 = por %p86, %p87
      %p90 = scmp.ne.s32.totalorder %s75, %s89
      %p91 = scmp.eq.s32.totalorder %s23, 0
      %p92 = por %p90, %p91
      %s94 = sadd.s32 %s93, 1
      %p97 = scmp.eq.s32.totalorder %s17, 1
      %p98 = scmp.ne.s32.totalorder %s93, %s95
      %p99 = scmp.eq.s32.totalorder %s17, 0
      %p100 = por %p98, %p99
      %p101 = scmp.ne.s32.totalorder %s93, %s95
      %p102 = scmp.eq.s32.totalorder %s22, 1
      %p103 = por %p101, %p102
      %p104 = scmp.ne.s32.totalorder %s95, %s96
      %p105 = scmp.eq.s32.totalorder %s22, 0
      %p106 = por %p104, %p105
      %p107 = scmp.ne.s32.totalorder %s95, %s96
      %p108 = scmp.eq.s32.totalorder %s23, 1
      %p109 = por %p107, %p108
      %p111 = scmp.ne.s32.totalorder %s96, %s110
      %p112 = scmp.eq.s32.totalorder %s23, 0
      %p113 = por %p111, %p112
      %s115 = sadd.s32 %s114, 1
      %p118 = scmp.eq.s32.totalorder %s17, 1
      %p119 = scmp.ne.s32.totalorder %s114, %s116
      %p120 = scmp.eq.s32.totalorder %s17, 0
      %p121 = por %p119, %p120
      %p122 = scmp.ne.s32.totalorder %s114, %s116
      %p123 = scmp.eq.s32.totalorder %s22, 1
      %p124 = por %p122, %p123
      %p125 = scmp.ne.s32.totalorder %s116, %s117
      %p126 = scmp.eq.s32.totalorder %s22, 0
      %p127 = por %p125, %p126
      %p128 = scmp.ne.s32.totalorder %s116, %s117
      %p129 = scmp.eq.s32.totalorder %s23, 1
      %p130 = por %p128, %p129
      %p132 = scmp.ne.s32.totalorder %s117, %s131
      %p133 = scmp.eq.s32.totalorder %s23, 0
      %p134 = por %p132, %p133
      %s136 = sadd.s32 %s135, 1
      %p139 = scmp.eq.s32.totalorder %s17, 1
      %p140 = scmp.ne.s32.totalorder %s135, %s137
      %p141 = scmp.eq.s32.totalorder %s17, 0
      %p142 = por %p140, %p141
      %p143 = scmp.ne.s32.totalorder %s135, %s137
      %p144 = scmp.eq.s32.totalorder %s22, 1
      %p145 = por %p143, %p144
      %p146 = scmp.ne.s32.totalorder %s137, %s138
      %p147 = scmp.eq.s32.totalorder %s22, 0
      %p148 = por %p146, %p147
      %p149 = scmp.ne.s32.totalorder %s137, %s138
      %p150 = scmp.eq.s32.totalorder %s23, 1
      %p151 = por %p149, %p150
      %p153 = scmp.ne.s32.totalorder %s138, %s152
      %p154 = scmp.eq.s32.totalorder %s23, 0
      %p155 = por %p153, %p154
      %s157 = sadd.s32 %s156, 1
      %p160 = scmp.eq.s32.totalorder %s17, 1
      %p161 = scmp.ne.s32.totalorder %s156, %s158
      %p162 = scmp.eq.s32.totalorder %s17, 0
      %p163 = por %p161, %p162
      %p164 = scmp.ne.s32.totalorder %s156, %s158
      %p165 = scmp.eq.s32.totalorder %s22, 1
      %p166 = por %p164, %p165
      %p167 = scmp.ne.s32.totalorder %s158, %s159
      %p168 = scmp.eq.s32.totalorder %s22, 0
      %p169 = por %p167, %p168
      %p170 = scmp.ne.s32.totalorder %s158, %s159
      %p171 = scmp.eq.s32.totalorder %s23, 1
      %p172 = por %p170, %p171
      %p174 = scmp.ne.s32.totalorder %s159, %s173
      %p175 = scmp.eq.s32.totalorder %s23, 0
      %p176 = por %p174, %p175
      %s177 = ssub.s32 %s17, %s24
      %p178 = scmp.eq.s32.totalorder %s177, 0
      %s180 = sadd.s32 %s179, 1
      %s181 = scalar_select %p178, %s179, %s180
      %p184 = pneg %p178
      %p185 = scmp.eq.s32.totalorder %s17, 1
      %p186 = por %p184, %p185
      %p187 = scmp.ne.s32.totalorder %s179, %s182
      %p188 = scmp.eq.s32.totalorder %s17, 0
      %p189 = por %p187, %p188
      %p190 = scmp.ne.s32.totalorder %s179, %s182
      %p191 = scmp.eq.s32.totalorder %s22, 1
      %p192 = por %p190, %p191
      %p193 = scmp.ne.s32.totalorder %s182, %s183
      %p194 = scmp.eq.s32.totalorder %s22, 0
      %p195 = por %p193, %p194
      %p196 = scmp.ne.s32.totalorder %s182, %s183
      %p197 = scmp.eq.s32.totalorder %s23, 1
      %p198 = por %p196, %p197
      %p200 = scmp.ne.s32.totalorder %s183, %s199
      %p201 = scmp.eq.s32.totalorder %s23, 0
      %p202 = por %p200, %p201
      %p203 = scmp.le.s32.totalorder 1, %s17
      %p204 = scmp.lt.s32.totalorder %s17, 3
      %p205 = pnand %p203, %p204
      %p206 = pneg %p205
      // Predicated region
      $region9: #{normalized_residual_block.1} parent=5 // pred_check
        _
      $region10: #{normalized_residual_block.1} parent=5 // pred_check_branch
        %208 = sbr.rel (%p205) target = $region12
      $region11: #{normalized_residual_block.1} parent=5 // pred_region
        %s209 = ssub.s32 %s17, 1
        // Predicated region
        $region13: #{normalized_residual_block.1} parent=11 // pred_check
          %p210 = pneg %p64
        $region14: #{normalized_residual_block.1} parent=11 // pred_check_branch
          %212 = sbr.rel (%p210) target = $region16
        $region15: #{normalized_residual_block.1} parent=11 // pred_region
          _
        $region16: #{normalized_residual_block.1} parent=11 // pred_fallthru
          _
        // Predicated region
        $region17: #{normalized_residual_block.1} parent=11 // pred_check
          %p213 = pneg %p85
        $region18: #{normalized_residual_block.1} parent=11 // pred_check_branch
          %215 = sbr.rel (%p213) target = $region20
        $region19: #{normalized_residual_block.1} parent=11 // pred_region
          _
        $region20: #{normalized_residual_block.1} parent=11 // pred_fallthru
          _
        // Predicated region
        $region21: #{normalized_residual_block.1} parent=11 // pred_check
          %p216 = pneg %p106
        $region22: #{normalized_residual_block.1} parent=11 // pred_check_branch
          %218 = sbr.rel (%p216) target = $region24
        $region23: #{normalized_residual_block.1} parent=11 // pred_region
          _
        $region24: #{normalized_residual_block.1} parent=11 // pred_fallthru
          _
        // Predicated region
        $region25: #{normalized_residual_block.1} parent=11 // pred_check
          %p219 = pneg %p127
        $region26: #{normalized_residual_block.1} parent=11 // pred_check_branch
          %221 = sbr.rel (%p219) target = $region28
        $region27: #{normalized_residual_block.1} parent=11 // pred_region
          _
        $region28: #{normalized_residual_block.1} parent=11 // pred_fallthru
          _
        // Predicated region
        $region29: #{normalized_residual_block.1} parent=11 // pred_check
          %p222 = pneg %p148
        $region30: #{normalized_residual_block.1} parent=11 // pred_check_branch
          %224 = sbr.rel (%p222) target = $region32
        $region31: #{normalized_residual_block.1} parent=11 // pred_region
          %s226 = ssub.s32 1024, 1024
          %227 = vsyncadd [#allocation4], %s226
          %s228 = sshll.u32 [#allocation3], 4
          %s229 = int_to_ptr.vmem [resolvable:$true] %s228
          %234 = dma.hbm_to_vmem [thread:$0]  %s5, 1024, %s229, [#allocation4], 64, 64, 4
        $region32: #{normalized_residual_block.1} parent=11 // pred_fallthru
          _
        // Predicated region
        $region33: #{normalized_residual_block.1} parent=11 // pred_check
          %p235 = pneg %p169
        $region34: #{normalized_residual_block.1} parent=11 // pred_check_branch
          %237 = sbr.rel (%p235) target = $region36
        $region35: #{normalized_residual_block.1} parent=11 // pred_region
          _
        $region36: #{normalized_residual_block.1} parent=11 // pred_fallthru
          _
      $region12: #{normalized_residual_block.1} parent=5 // pred_fallthru
        _
      %p238 = scmp.lt.s32.totalorder %s17, 2
      // Predicated region
      $region37: #{normalized_residual_block.1} parent=5 // pred_check
        %p239 = pneg %p238
      $region38: #{normalized_residual_block.1} parent=5 // pred_check_branch
        %241 = sbr.rel (%p239) target = $region40
      $region39: #{normalized_residual_block.1} parent=5 // pred_region
        // Predicated region
        $region41: #{normalized_residual_block.1} parent=39 // pred_check
          %p242 = pneg %p37
        $region42: #{normalized_residual_block.1} parent=39 // pred_check_branch
          %244 = sbr.rel (%p242) target = $region44
        $region43: #{normalized_residual_block.1} parent=39 // pred_region
          %p245 = scmp.lt.s32.totalorder %s17, 1
          %s246 = scalar_select %p245, %s17, 1
          %s247 = smul.addr %s246, 8
          %s248 = scalar_lea.vmem %s0, %s247
        $region44: #{normalized_residual_block.1} parent=39 // pred_fallthru
          _
      $region40: #{normalized_residual_block.1} parent=5 // pred_fallthru
        _
      %p249 = scmp.le.s32.totalorder 1, %s17
      %p250 = scmp.lt.s32.totalorder %s17, 3
      %p251 = pnand %p249, %p250
      %p252 = pneg %p251
      // Predicated region
      $region45: #{normalized_residual_block.1} parent=5 // pred_check
        _
      $region46: #{normalized_residual_block.1} parent=5 // pred_check_branch
        %254 = sbr.rel (%p251) target = $region48
      $region47: #{normalized_residual_block.1} parent=5 // pred_region
        %s255 = ssub.s32 %s17, 1
        // Predicated region
        $region49: #{normalized_residual_block.1} parent=47 // pred_check
          %p256 = pneg %p148
        $region50: #{normalized_residual_block.1} parent=47 // pred_check_branch
          %258 = sbr.rel (%p256) target = $region52
        $region51: #{normalized_residual_block.1} parent=47 // pred_region
          %259 = dma.done [#allocation4], 1024
        $region52: #{normalized_residual_block.1} parent=47 // pred_fallthru
          _
        %p260 = scmp.lt.s32.totalorder %s22, 1
        %s261 = scalar_select %p260, %s22, 1
        %s262 = smul.addr %s261, 8
        %s263 = scalar_lea.vmem %s0, %s262
        %p264 = pneg %p43
        %p265 = pneg %p40
        %p266 = pneg %p64
        %p267 = pneg %p61
        %p268 = pneg %p85
        %p269 = pneg %p82
        %p270 = pneg %p106
        %p271 = pneg %p103
        %p272 = pneg %p127
        %p273 = pneg %p124
        %p274 = pneg %p148
        %p275 = pneg %p145
        %p276 = pneg %p169
        %p277 = pneg %p166
        %p278 = pneg %p195
        %p279 = pneg %p192
        %s280 = sand.u32 %s182, 1
        %s281 = scalar_lea.sflag [#allocation5], %s280
        %s282 = sand.u32 %s182, 1
        %s283 = smul.addr %s282, 8
        %s284 = scalar_lea.vmem [#allocation6], %s283
        %p285 = scmp.lt.s32.totalorder %s22, 1
        %s286 = scalar_select %p285, %s22, 1
        %s287 = smul.addr %s286, 8
        %s288 = scalar_lea.vmem %s0, %s287
        %v290 = vld [vmem:[%s288] sm:$0xff]
        %291 = vadd.xlane.f32.xlu0 %v290
        %v292 = vpop.xlane.xlu0 %291
        %v293 = vmul.f32 %v292, 0.03125
        %v294 = vsub.f32 %v290, %v293
        %v295 = vlaneseq
        %v296 = vand.u32 %v295, 127
        %vm297 = vcmp.lt.s32.totalorder %v296, 32
        %v298 = vsel %vm297, 1, 0
        %vm299 = vcmp.eq.s32.totalorder %v298, 1
        %v300 = vsel %vm299, %v294, 0.0
        %v301 = vmul.f32 %v300, %v300
        %302 = vadd.xlane.f32.xlu0 %v301
        %v303 = vpop.xlane.xlu0 %302
        %v304 = vmul.f32 %v303, 0.03125
        %v305 = vadd.f32 %v304, 1e-05
        %v306 = vrsqrt.pop %v305
        %v307 = vmul.f32 %v294, %v306
        %v308 = vld [vmem:[%s1] sm:$0x1]
        %v310 = vlaneseq
        %v311 = vshrl.u32 %v310, 7
        %v312 = vsub.s32 0, %v311
        %v313 = vrot.slane %v308, %v312
        %v315 = vmul.f32 %v307, %v313
        %v316 = vld [vmem:[%s2] sm:$0x1]
        %v318 = vlaneseq
        %v319 = vshrl.u32 %v318, 7
        %v320 = vsub.s32 0, %v319
        %v321 = vrot.slane %v316, %v320
        %v323 = vadd.f32 %v315, %v321
        %v324 = vpack.c.bf16 %v323, %v323
        %325 = vst [vmem:[#allocation2] sm:$0xff] 0.0
        %v326 = vld [vmem:[%s3] sm:$0xf]
        %v327 = vld [vmem:[%s3 + $0x4] sm:$0xf]
        %v328 = vld [vmem:[%s3 + $0x8] sm:$0xf]
        %v329 = vld [vmem:[%s3 + $0xc] sm:$0xf]
        %v330 = vld [vmem:[%s3 + $0x10] sm:$0xf]
        %v331 = vld [vmem:[%s3 + $0x14] sm:$0xf]
        %v332 = vld [vmem:[%s3 + $0x18] sm:$0xf]
        %v333 = vld [vmem:[%s3 + $0x1c] sm:$0xf]
        %v334 = vld [vmem:[%s3 + $0x20] sm:$0xf]
        %v335 = vld [vmem:[%s3 + $0x24] sm:$0xf]
        %v336 = vld [vmem:[%s3 + $0x28] sm:$0xf]
        %v337 = vld [vmem:[%s3 + $0x2c] sm:$0xf]
        %v338 = vld [vmem:[%s3 + $0x30] sm:$0xf]
        %v339 = vld [vmem:[%s3 + $0x34] sm:$0xf]
        %v340 = vld [vmem:[%s3 + $0x38] sm:$0xf]
        %v341 = vld [vmem:[%s3 + $0x3c] sm:$0xf]
        %v342 = vld [vmem:[%s4] sm:$0x1]
        %v344 = vlaneseq
        %v345 = vshrl.u32 %v344, 7
        %v346 = vsub.s32 0, %v345
        %v347 = vrot.slane %v342, %v346
        %v365 = vunpack.c.l.b16 %v326
        %v366 = vunpack.c.l.b16 %v327
        %v367 = vunpack.c.l.b16 %v328
        %v368 = vunpack.c.l.b16 %v329
        %v369 = vunpack.c.l.b16 %v330
        %v370 = vunpack.c.l.b16 %v331
        %v371 = vunpack.c.l.b16 %v332
        %v372 = vunpack.c.l.b16 %v333
        %v373 = vunpack.c.l.b16 %v334
        %v374 = vunpack.c.l.b16 %v335
        %v375 = vunpack.c.l.b16 %v336
        %v376 = vunpack.c.l.b16 %v337
        %v377 = vunpack.c.l.b16 %v338
        %v378 = vunpack.c.l.b16 %v339
        %v379 = vunpack.c.l.b16 %v340
        %v380 = vunpack.c.l.b16 %v341
        %v381 = vpack.c.b16 %v366, %v365
        %v382 = vpack.c.b16 %v368, %v367
        %v383 = vpack.c.b16 %v370, %v369
        %v384 = vpack.c.b16 %v372, %v371
        %v385 = vpack.c.b16 %v374, %v373
        %v386 = vpack.c.b16 %v376, %v375
        %v387 = vpack.c.b16 %v378, %v377
        %v388 = vpack.c.b16 %v380, %v379
        %397 = vmatprep.subr.bf16.mxu0 0
        %398 = vmatpush1.bf16.msra.mxu0 %v381
        %399 = vmatprep.subr.bf16.mxu0 0
        %400 = vmatpush1.bf16.msra.mxu0 %v382
        %401 = vmatprep.subr.bf16.mxu0 0
        %402 = vmatpush1.bf16.msra.mxu0 %v383
        %403 = vmatprep.subr.bf16.mxu0 0
        %404 = vmatpush1.bf16.msra.mxu0 %v384
        %405 = vmatprep.subr.bf16.mxu0 0
        %406 = vmatpush1.bf16.msra.mxu0 %v385
        %407 = vmatprep.subr.bf16.mxu0 0
        %408 = vmatpush1.bf16.msra.mxu0 %v386
        %409 = vmatprep.subr.bf16.mxu0 0
        %410 = vmatpush1.bf16.msra.mxu0 %v387
        %411 = vmatprep.subr.bf16.mxu0 0
        %412 = vmatpush1.bf16.msra.mxu0 %v388
        %413 = vmatprep.subr.bf16.mxu0 0
        %414 = vmatpush1.bf16.msra.mxu0 0
        %415 = vmatprep.subr.bf16.mxu0 0
        %416 = vmatpush1.bf16.msra.mxu0 0
        %417 = vmatprep.subr.bf16.mxu0 0
        %418 = vmatpush1.bf16.msra.mxu0 0
        %419 = vmatprep.subr.bf16.mxu0 0
        %420 = vmatpush1.bf16.msra.mxu0 0
        %421 = vmatprep.subr.bf16.mxu0 0
        %422 = vmatpush1.bf16.msra.mxu0 0
        %423 = vmatprep.subr.bf16.mxu0 0
        %424 = vmatpush1.bf16.msra.mxu0 0
        %425 = vmatprep.subr.bf16.mxu0 0
        %426 = vmatpush1.bf16.msra.mxu0 0
        %427 = vmatprep.subr.bf16.mxu0 0
        %428 = vmatpush1.bf16.msra.mxu0 0
        %429 = vmatprep.mubr.bf16.mxu0 0
        %430 = vmatmul.mubr.bf16.gmra.mrb[0].mxu0 %v324
        %v431 = vpop.f32.mrb[0].mxu0
        %v432 = vadd.f32 %v347, %v431
        %v433 = vpop.f32.mrb[0].mxu0
        %v434 = vpop.f32.mrb[0].mxu0
        %v435 = vpop.f32.mrb[0].mxu0
        %436 = vdwg.mxu0
        %v437 = vmul.f32 %v432, %v432
        %v438 = vmul.f32 %v432, %v437
        %v439 = vmul.f32 %v438, 0.044715
        %v440 = vadd.f32 %v432, %v439
        %v441 = vmul.f32 %v440, 0.7978846
        %v442 = vtanh.pop %v441
        %v443 = vadd.f32 %v442, 1.0
        %v444 = vmul.f32 %v443, 0.5
        %v445 = vmul.f32 %v432, %v444
        %v446 = vld [vmem:[#allocation2] sm:$0xff]
        %v447 = vpack.c.bf16 %v445, %v445
        %v448 = vld [vmem:[#allocation3] sm:$0xf]
        %v449 = vld [vmem:[#allocation3 + $0x4] sm:$0xf]
        %v450 = vld [vmem:[#allocation3 + $0x8] sm:$0xf]
        %v451 = vld [vmem:[#allocation3 + $0xc] sm:$0xf]
        %v452 = vld [vmem:[#allocation3 + $0x10] sm:$0xf]
        %v453 = vld [vmem:[#allocation3 + $0x14] sm:$0xf]
        %v454 = vld [vmem:[#allocation3 + $0x18] sm:$0xf]
        %v455 = vld [vmem:[#allocation3 + $0x1c] sm:$0xf]
        %v456 = vld [vmem:[#allocation3 + $0x20] sm:$0xf]
        %v457 = vld [vmem:[#allocation3 + $0x24] sm:$0xf]
        %v458 = vld [vmem:[#allocation3 + $0x28] sm:$0xf]
        %v459 = vld [vmem:[#allocation3 + $0x2c] sm:$0xf]
        %v460 = vld [vmem:[#allocation3 + $0x30] sm:$0xf]
        %v461 = vld [vmem:[#allocation3 + $0x34] sm:$0xf]
        %v462 = vld [vmem:[#allocation3 + $0x38] sm:$0xf]
        %v463 = vld [vmem:[#allocation3 + $0x3c] sm:$0xf]
        %v480 = vunpack.c.l.b16 %v448
        %v481 = vunpack.c.l.b16 %v449
        %v482 = vunpack.c.l.b16 %v450
        %v483 = vunpack.c.l.b16 %v451
        %v484 = vunpack.c.l.b16 %v452
        %v485 = vunpack.c.l.b16 %v453
        %v486 = vunpack.c.l.b16 %v454
        %v487 = vunpack.c.l.b16 %v455
        %v488 = vunpack.c.l.b16 %v456
        %v489 = vunpack.c.l.b16 %v457
        %v490 = vunpack.c.l.b16 %v458
        %v491 = vunpack.c.l.b16 %v459
        %v492 = vunpack.c.l.b16 %v460
        %v493 = vunpack.c.l.b16 %v461
        %v494 = vunpack.c.l.b16 %v462
        %v495 = vunpack.c.l.b16 %v463
        %v496 = vpack.c.b16 %v481, %v480
        %v497 = vpack.c.b16 %v483, %v482
        %v498 = vpack.c.b16 %v485, %v484
        %v499 = vpack.c.b16 %v487, %v486
        %v500 = vpack.c.b16 %v489, %v488
        %v501 = vpack.c.b16 %v491, %v490
        %v502 = vpack.c.b16 %v493, %v492
        %v503 = vpack.c.b16 %v495, %v494
        %512 = vmatprep.subr.bf16.mxu0 0
        %513 = vmatpush1.bf16.msra.mxu0 %v496
        %514 = vmatprep.subr.bf16.mxu0 0
        %515 = vmatpush1.bf16.msra.mxu0 %v497
        %516 = vmatprep.subr.bf16.mxu0 0
        %517 = vmatpush1.bf16.msra.mxu0 %v498
        %518 = vmatprep.subr.bf16.mxu0 0
        %519 = vmatpush1.bf16.msra.mxu0 %v499
        %520 = vmatprep.subr.bf16.mxu0 0
        %521 = vmatpush1.bf16.msra.mxu0 %v500
        %522 = vmatprep.subr.bf16.mxu0 0
        %523 = vmatpush1.bf16.msra.mxu0 %v501
        %524 = vmatprep.subr.bf16.mxu0 0
        %525 = vmatpush1.bf16.msra.mxu0 %v502
        %526 = vmatprep.subr.bf16.mxu0 0
        %527 = vmatpush1.bf16.msra.mxu0 %v503
        %528 = vmatprep.subr.bf16.mxu0 0
        %529 = vmatpush1.bf16.msra.mxu0 0
        %530 = vmatprep.subr.bf16.mxu0 0
        %531 = vmatpush1.bf16.msra.mxu0 0
        %532 = vmatprep.subr.bf16.mxu0 0
        %533 = vmatpush1.bf16.msra.mxu0 0
        %534 = vmatprep.subr.bf16.mxu0 0
        %535 = vmatpush1.bf16.msra.mxu0 0
        %536 = vmatprep.subr.bf16.mxu0 0
        %537 = vmatpush1.bf16.msra.mxu0 0
        %538 = vmatprep.subr.bf16.mxu0 0
        %539 = vmatpush1.bf16.msra.mxu0 0
        %540 = vmatprep.subr.bf16.mxu0 0
        %541 = vmatpush1.bf16.msra.mxu0 0
        %542 = vmatprep.subr.bf16.mxu0 0
        %543 = vmatpush1.bf16.msra.mxu0 0
        %544 = vmatprep.mubr.bf16.mxu0 0
        %545 = vmatmul.mubr.bf16.gmra.mrb[0].mxu0 %v447
        %v546 = vpop.f32.mrb[0].mxu0
        %v547 = vadd.f32 0.0, %v546
        %v548 = vpop.f32.mrb[0].mxu0
        %v549 = vpop.f32.mrb[0].mxu0
        %v550 = vpop.f32.mrb[0].mxu0
        %551 = vdwg.mxu0
        %v552 = vadd.f32 %v446, %v547
        %553 = vst [vmem:[#allocation2] sm:$0xff] %v552
        %v554 = vld [vmem:[#allocation2] sm:$0xff]
        %v555 = vld [vmem:[%s6] sm:$0x1]
        %v557 = vlaneseq
        %v558 = vshrl.u32 %v557, 7
        %v559 = vsub.s32 0, %v558
        %v560 = vrot.slane %v555, %v559
        %v562 = vadd.f32 %v554, %v560
        %v563 = vld [vmem:[%s288] sm:$0xff]
        %v564 = vadd.f32 %v562, %v563
        %565 = vst [vmem:[%s284] sm:$0xff] %v564
        %s566 = sand.u32 %s182, 1
        %s567 = scalar_lea.sflag [#allocation5], %s566
        %s568 = sand.u32 %s182, 1
        %s569 = smul.addr %s568, 8
        %s570 = scalar_lea.vmem [#allocation6], %s569
        // Predicated region
        $region53: #{normalized_residual_block.1} parent=47 // pred_check
          %p571 = pneg %p192
        $region54: #{normalized_residual_block.1} parent=47 // pred_check_branch
          %573 = sbr.rel (%p571) target = $region56
        $region55: #{normalized_residual_block.1} parent=47 // pred_region
          %s575 = ssub.s32 128, 128
          %576 = vsyncadd %s567, %s575
          %s577 = smul.addr %s22, 128
          %s578 = scalar_lea.hbm %s7, %s577
          %s580 = sshll.u32 %s570, 4
          %s581 = int_to_ptr.vmem [resolvable:$true] %s580
          %583 = dma.vmem_to_hbm [thread:$0]  %s581, 128, %s578, %s567
        $region56: #{normalized_residual_block.1} parent=47 // pred_fallthru
          _
      $region48: #{normalized_residual_block.1} parent=5 // pred_fallthru
        _
      %p584 = scmp.le.s32.totalorder 2, %s17
      // Predicated region
      $region57: #{normalized_residual_block.1} parent=5 // pred_check
        %p585 = pneg %p584
      $region58: #{normalized_residual_block.1} parent=5 // pred_check_branch
        %587 = sbr.rel (%p585) target = $region60
      $region59: #{normalized_residual_block.1} parent=5 // pred_region
        %s588 = ssub.s32 %s17, 2
        // Predicated region
        $region61: #{normalized_residual_block.1} parent=59 // pred_check
          %p589 = pneg %p198
        $region62: #{normalized_residual_block.1} parent=59 // pred_check_branch
          %591 = sbr.rel (%p589) target = $region64
        $region63: #{normalized_residual_block.1} parent=59 // pred_region
          %s592 = sand.u32 %s183, 1
          %s593 = scalar_lea.sflag [#allocation5], %s592
          %s594 = sand.u32 %s183, 1
          %s595 = smul.addr %s594, 8
          %s596 = scalar_lea.vmem [#allocation6], %s595
          %597 = dma.done %s593, 128
        $region64: #{normalized_residual_block.1} parent=59 // pred_fallthru
          _
      $region60: #{normalized_residual_block.1} parent=5 // pred_fallthru
        _
    $region6: #{normalized_residual_block.1} parent=1 // loop_footer
      %s21 = sadd.s32 1, %s17
    $region7: #{normalized_residual_block.1} parent=1 // loop_footer_branch
      %16 = sbr.rel target = $region3
    $region8: #{normalized_residual_block.1} parent=1 // loop_exit
      _
    %598 = vsyncpa [#allocation4], 1
    %s599 = scalar_lea.sflag [#allocation4], 1
    %600 = vsyncpa %s599, 1
    %601 = vsyncpa [#allocation5], 1
    %s602 = scalar_lea.sflag [#allocation5], 1
    %603 = vsyncpa %s602, 1

</llo_original>
